<compile_context>
chip_gen: v7x
topology: tpu7x:2x2x1
jax: 0.10.0
libtpu: 0.0.40
codegen_flags: <defaults>
</compile_context>

<pallas_src>
import functools

import jax
import jax.numpy as jnp
from jax import lax
from jax.experimental import pallas as pl
from jax.experimental.pallas import tpu as pltpu


def _pick_batch_tile(B, max_tile=512):
    """Largest batch tile <= max_tile that divides B (multiple of 8 if tiling)."""
    if B <= max_tile:
        return B
    for tb in range(max_tile, 7, -1):
        if B % tb == 0 and tb % 8 == 0:
            return tb
    return B


# ---------------------------------------------------------------------------
# Train kernel: fused lane-dense matmul (all terms at once) + log_softmax.
# ---------------------------------------------------------------------------
def _train_kernel(x_ref, wf_ref, bf_ref, c_ref, pred_ref, logpy_ref):
    # x: (TB, Din)  wf: (Din, T*Dout)  bf: (1, T*Dout)  c: (TB, T)
    acc = jnp.dot(x_ref[...], wf_ref[...], preferred_element_type=jnp.float32)
    pred_ref[...] = acc + bf_ref[...]                       # lane-dense store

    c = c_ref[...]
    m = jnp.max(c, axis=1, keepdims=True)
    z = c - m
    lse = jnp.log(jnp.sum(jnp.exp(z), axis=1, keepdims=True))
    logpy_ref[...] = z - lse


# ---------------------------------------------------------------------------
# Test kernel: fused matmul + argmax selection; only (B, Dout) leaves the chip.
# ---------------------------------------------------------------------------
def _test_kernel(x_ref, wf_ref, bf_ref, c_ref, sel_ref, *, T, Dout):
    pred = jnp.dot(x_ref[...], wf_ref[...], preferred_element_type=jnp.float32)
    pred = pred + bf_ref[...]                               # (TB, T*Dout) in VMEM

    c = c_ref[...]                                          # (TB, T)
    TB = c.shape[0]
    iota_t = lax.broadcasted_iota(jnp.int32, (TB, T), 1)
    m = jnp.max(c, axis=1, keepdims=True)
    # first index attaining the max (matches torch argmax tie-breaking);
    # argmax(log_softmax(c)) == argmax(c), so no log_softmax needed here.
    idx = jnp.min(jnp.where(c >= m, iota_t, T), axis=1)     # (TB,)

    sel = jnp.zeros((TB, Dout), jnp.float32)
    for t in range(T):  # small static unroll; static lane slices of pred
        chunk = pred[:, t * Dout:(t + 1) * Dout]
        sel = jnp.where((idx == t)[:, None], chunk, sel)
    sel_ref[...] = sel


# ---------------------------------------------------------------------------
# Host-side parameter fusion (done once; in a real model, at init time).
# ---------------------------------------------------------------------------
def _fuse_params(W, b):
    # W: (T, Din, Dout), b: (T, 1, Dout) -> Wf: (Din, T*Dout), bf: (1, T*Dout)
    T, Din, Dout = W.shape
    Wf = jnp.transpose(W, (1, 0, 2)).reshape(Din, T * Dout)
    bf = b[:, 0, :].reshape(1, T * Dout)
    return Wf, bf


# ---------------------------------------------------------------------------
# OrList.forward
# ---------------------------------------------------------------------------
def orlist_forward(x, class_prediction, W, b, test=False):
    B, Din = x.shape
    T, _, Dout = W.shape
    N = T * Dout
    Wf, bf = _fuse_params(W, b)

    TB = _pick_batch_tile(B)
    grid = (B // TB,)
    cparams = pltpu.CompilerParams(dimension_semantics=("parallel",))

    common_in_specs = [
        pl.BlockSpec((TB, Din), lambda i: (i, 0)),
        pl.BlockSpec((Din, N), lambda i: (0, 0)),   # constant block -> stays resident
        pl.BlockSpec((1, N), lambda i: (0, 0)),
        pl.BlockSpec((TB, T), lambda i: (i, 0)),
    ]

    if test:
        return pl.pallas_call(
            functools.partial(_test_kernel, T=T, Dout=Dout),
            out_shape=jax.ShapeDtypeStruct((B, Dout), jnp.float32),
            grid=grid,
            in_specs=common_in_specs,
            out_specs=pl.BlockSpec((TB, Dout), lambda i: (i, 0)),
            compiler_params=cparams,
        )(x, Wf, bf, class_prediction)

    pred_flat, log_py = pl.pallas_call(
        _train_kernel,
        out_shape=(
            jax.ShapeDtypeStruct((B, N), jnp.float32),
            jax.ShapeDtypeStruct((B, T), jnp.float32),
        ),
        grid=grid,
        in_specs=common_in_specs,
        out_specs=(
            pl.BlockSpec((TB, N), lambda i: (i, 0)),
            pl.BlockSpec((TB, T), lambda i: (i, 0)),
        ),
        compiler_params=cparams,
    )(x, Wf, bf, class_prediction)

    # (B, T*Dout) -> (B, T, Dout): pure row-major view (torch.stack dim=1 layout).
    pred = pred_flat.reshape(B, T, Dout)
    return pred, log_py


if __name__ == "__main__":
    B, T, Din, Dout = 8, 4, 32, 16

    key = jax.random.PRNGKey(0)
    kx, kc, kw, kb = jax.random.split(key, 4)
    x = jax.random.normal(kx, (B, Din), dtype=jnp.float32)
    class_prediction = jax.random.normal(kc, (B, T), dtype=jnp.float32)
    W = 0.1 * jax.random.normal(kw, (T, Din, Dout), dtype=jnp.float32)
    b = 0.1 * jax.random.normal(kb, (T, 1, Dout), dtype=jnp.float32)

    # forward (test=False): returns (pred, log_py)
    pred, log_py = orlist_forward(x, class_prediction, W, b, test=False)
    pred = jax.block_until_ready(pred)
    log_py = jax.block_until_ready(log_py)

    # forward (test=True): returns pred[arange(B), argmax(log_py)]
    sel = jax.block_until_ready(orlist_forward(x, class_prediction, W, b, test=True))

    # reference check in plain JAX
    pred_ref = jnp.einsum("bi,tio->bto", x, W) + b[:, 0, :][None, :, :]
    log_py_ref = jax.nn.log_softmax(class_prediction, axis=1)
    sel_ref = pred_ref[jnp.arange(B), jnp.argmax(log_py_ref, axis=1)]

    assert jnp.allclose(pred, pred_ref, rtol=1e-5, atol=1e-5)
    assert jnp.allclose(log_py, log_py_ref, rtol=1e-5, atol=1e-5)
    assert jnp.allclose(sel, sel_ref, rtol=1e-5, atol=1e-5)

    print("KERNEL_OK")
</pallas_src>

<mosaic_0001>
module attributes {stable_mosaic.version = 11 : i64} {
  func.func @_train_kernel(%arg0: i32, %arg1: memref<8x32xf32, #tpu.memory_space<vmem>>, %arg2: memref<32x64xf32, #tpu.memory_space<vmem>>, %arg3: memref<1x64xf32, #tpu.memory_space<vmem>>, %arg4: memref<8x4xf32, #tpu.memory_space<vmem>>, %arg5: memref<8x64xf32, #tpu.memory_space<vmem>>, %arg6: memref<8x4xf32, #tpu.memory_space<vmem>>) attributes {dimension_semantics = [#tpu.dimension_semantics<parallel>], iteration_bounds = array<i64: 1>, scalar_prefetch = 0 : i64, scratch_operands = 0 : i64, tpu.core_type = #tpu.core_type<tc>, window_params = [{transform_indices = @transform_0, window_bounds = array<i64: 8, 32>}, {pipeline_mode = #tpu.pipeline_mode<synchronous>, transform_indices = @transform_1, window_bounds = array<i64: 32, 64>}, {pipeline_mode = #tpu.pipeline_mode<synchronous>, transform_indices = @transform_2, window_bounds = array<i64: 1, 64>}, {transform_indices = @transform_3, window_bounds = array<i64: 8, 4>}, {transform_indices = @transform_4, window_bounds = array<i64: 8, 64>}, {transform_indices = @transform_5, window_bounds = array<i64: 8, 4>}]} {
    %c0 = arith.constant 0 : index
    %c0_0 = arith.constant 0 : index
    %0 = vector.load %arg1[%c0, %c0_0] : memref<8x32xf32, #tpu.memory_space<vmem>>, vector<8x32xf32>
    %c0_1 = arith.constant 0 : index
    %c0_2 = arith.constant 0 : index
    %1 = vector.load %arg2[%c0_1, %c0_2] : memref<32x64xf32, #tpu.memory_space<vmem>>, vector<32x64xf32>
    %cst = arith.constant dense<0.000000e+00> : vector<8x64xf32>
    %2 = tpu.matmul %0, %1, %cst {dimension_numbers = #tpu.dot_dimension_numbers<[1], [0], [0], [1], [0, 0, 1, 1], [], []>} : vector<8x32xf32>, vector<32x64xf32>, vector<8x64xf32> -> vector<8x64xf32>
    %c0_3 = arith.constant 0 : index
    %c0_4 = arith.constant 0 : index
    %3 = vector.load %arg3[%c0_3, %c0_4] : memref<1x64xf32, #tpu.memory_space<vmem>>, vector<1x64xf32>
    %4 = vector.broadcast %3 : vector<1x64xf32> to vector<8x64xf32>
    %5 = arith.addf %2, %4 : vector<8x64xf32>
    %c0_5 = arith.constant 0 : index
    %c0_6 = arith.constant 0 : index
    %6 = vector.load %arg5[%c0_5, %c0_6] : memref<8x64xf32, #tpu.memory_space<vmem>>, vector<8x64xf32>
    tpu.vector_store %arg5[%c0_5, %c0_6], %5 {strides = array<i32>} : memref<8x64xf32, #tpu.memory_space<vmem>>, vector<8x64xf32>,
    %c0_7 = arith.constant 0 : index
    %c0_8 = arith.constant 0 : index
    %7 = vector.load %arg4[%c0_7, %c0_8] : memref<8x4xf32, #tpu.memory_space<vmem>>, vector<8x4xf32>
    %cst_9 = arith.constant dense<0xFF800000> : vector<8xf32>
    %8 = vector.multi_reduction <maximumf>, %7, %cst_9 [1] : vector<8x4xf32> to vector<8xf32>
    %9 = vector.shape_cast %8 : vector<8xf32> to vector<8x1xf32>
    %10 = vector.broadcast %9 : vector<8x1xf32> to vector<8x4xf32>
    %11 = arith.subf %7, %10 : vector<8x4xf32>
    %12 = math.exp %11 : vector<8x4xf32>
    %cst_10 = arith.constant dense<0.000000e+00> : vector<8xf32>
    %13 = vector.multi_reduction <add>, %12, %cst_10 [1] : vector<8x4xf32> to vector<8xf32>
    %14 = vector.shape_cast %13 : vector<8xf32> to vector<8x1xf32>
    %15 = math.log %14 : vector<8x1xf32>
    %16 = vector.broadcast %15 : vector<8x1xf32> to vector<8x4xf32>
    %17 = arith.subf %11, %16 : vector<8x4xf32>
    %c0_11 = arith.constant 0 : index
    %c0_12 = arith.constant 0 : index
    %18 = vector.load %arg6[%c0_11, %c0_12] : memref<8x4xf32, #tpu.memory_space<vmem>>, vector<8x4xf32>
    tpu.vector_store %arg6[%c0_11, %c0_12], %17 {strides = array<i32>} : memref<8x4xf32, #tpu.memory_space<vmem>>, vector<8x4xf32>,
    return
  }
  func.func @transform_0(%arg0: i32) -> (i32, i32) {
    %c0_i32 = arith.constant 0 : i32
    %c0_i32_0 = arith.constant 0 : i32
    return %arg0, %c0_i32 : i32, i32
  }
  func.func @transform_1(%arg0: i32) -> (i32, i32) {
    %c0_i32 = arith.constant 0 : i32
    %c0_i32_0 = arith.constant 0 : i32
    %c0_i32_1 = arith.constant 0 : i32
    return %c0_i32, %c0_i32_0 : i32, i32
  }
  func.func @transform_2(%arg0: i32) -> (i32, i32) {
    %c0_i32 = arith.constant 0 : i32
    %c0_i32_0 = arith.constant 0 : i32
    %c0_i32_1 = arith.constant 0 : i32
    return %c0_i32, %c0_i32_0 : i32, i32
  }
  func.func @transform_3(%arg0: i32) -> (i32, i32) {
    %c0_i32 = arith.constant 0 : i32
    %c0_i32_0 = arith.constant 0 : i32
    return %arg0, %c0_i32 : i32, i32
  }
  func.func @transform_4(%arg0: i32) -> (i32, i32) {
    %c0_i32 = arith.constant 0 : i32
    %c0_i32_0 = arith.constant 0 : i32
    return %arg0, %c0_i32 : i32, i32
  }
  func.func @transform_5(%arg0: i32) -> (i32, i32) {
    %c0_i32 = arith.constant 0 : i32
    %c0_i32_0 = arith.constant 0 : i32
    return %arg0, %c0_i32 : i32, i32
  }
}

</mosaic_0001>

<llo_original>
// kernel: tpu_custom_call.1
$region0: #{tpu_custom_call.1}
  #allocation0 [shape = 'u32[]', space=smem, size = 0x4, offset = 0x4, fixed_abs, tag = 'smem constant byte address 0x4 - core index']
  #allocation1 [shape = 'u32[144,128]{1,0:T(1,128)}', space=vmem, size = 0x12000, scoped, tag = 'internal scratch']
  %s0 = inlined_call_operand.vmem [shape: f32[8,32], index: 0, kind: input, shape index: {}]
  %s1 = inlined_call_operand.hbm [shape: f32[32,64], index: 1, kind: input, shape index: {}]
  %s2 = inlined_call_operand.vmem [shape: f32[1,64], index: 2, kind: input, shape index: {}]
  %s3 = inlined_call_operand.vmem [shape: f32[8,4], index: 3, kind: input, shape index: {}]
  %s4 = inlined_call_operand.hbm [shape: f32[8,64], index: 4, kind: output, shape index: {0}]
  %s5 = inlined_call_operand.vmem [shape: f32[8,4], index: 5, kind: output, shape index: {1}]
  %6 = xla_tuple %s4, %s5
  %s7 = sld [smem:[#allocation0]]
  $region38: #{tpu_custom_call.1} parent=0
    _
  %s9 = ssub.s32 1, %s7
  %s10 = scalar_select 0, %s9, %s7
  $region1: #{tpu_custom_call.1} parent=0
    #allocation2 [shape = 'u8[16384]{0}', space=vmem, size = 0x4000, scoped, tag = 'input window, operand 1, single buffered']
    #allocation3 [shape = 's32[1]{0}', space=sflag, size = 0x4, scoped, tag = 'scoped memory for tpu_custom_call.1']
    #allocation4 [shape = 's32[1]{0}', space=sflag, size = 0x4, scoped, tag = 'scoped memory for tpu_custom_call.1']
    #allocation5 [shape = 'u8[4096]{0}', space=vmem, size = 0x1000, scoped, tag = 'output window, operand 0, single buffered']
    %11 = vsyncpa [#allocation3], 0
    %12 = vsyncpa [#allocation4], 0
    // Predicated region
    $region2: #{tpu_custom_call.1} parent=1 // pred_check
      _
    $region3: #{tpu_custom_call.1} parent=1 // pred_check_branch
      %14 = sbr.rel (0) target = $region5
    $region4: #{tpu_custom_call.1} parent=1 // pred_region
      _
    $region5: #{tpu_custom_call.1} parent=1 // pred_fallthru
      _
    // Predicated region
    $region6: #{tpu_custom_call.1} parent=1 // pred_check
      _
    $region7: #{tpu_custom_call.1} parent=1 // pred_check_branch
      %16 = sbr.rel (0) target = $region9
    $region8: #{tpu_custom_call.1} parent=1 // pred_region
      %s18 = ssub.s32 512, 512
      %19 = vsyncadd [#allocation3], %s18
      %s20 = sshll.u32 [#allocation2], 4
      %s21 = int_to_ptr.vmem [resolvable:$true] %s20
      %26 = dma.hbm_to_vmem [thread:$0]  %s1, 512, %s21, [#allocation3], 128, 128, 8
    $region9: #{tpu_custom_call.1} parent=1 // pred_fallthru
      _
    // Predicated region
    $region10: #{tpu_custom_call.1} parent=1 // pred_check
      _
    $region11: #{tpu_custom_call.1} parent=1 // pred_check_branch
      %28 = sbr.rel (0) target = $region13
    $region12: #{tpu_custom_call.1} parent=1 // pred_region
      _
    $region13: #{tpu_custom_call.1} parent=1 // pred_fallthru
      _
    // Predicated region
    $region14: #{tpu_custom_call.1} parent=1 // pred_check
      _
    $region15: #{tpu_custom_call.1} parent=1 // pred_check_branch
      %30 = sbr.rel (0) target = $region17
    $region16: #{tpu_custom_call.1} parent=1 // pred_region
      _
    $region17: #{tpu_custom_call.1} parent=1 // pred_fallthru
      _
    // Predicated region
    $region18: #{tpu_custom_call.1} parent=1 // pred_check
      _
    $region19: #{tpu_custom_call.1} parent=1 // pred_check_branch
      %32 = sbr.rel (0) target = $region21
    $region20: #{tpu_custom_call.1} parent=1 // pred_region
      %33 = dma.done [#allocation3], 512
    $region21: #{tpu_custom_call.1} parent=1 // pred_fallthru
      _
    %v34 = vld [vmem:[%s0] sm:$0xff]
    %v35 = vld [vmem:[#allocation2] sm:$0xff]
    %v36 = vld [vmem:[#allocation2 + $0x8] sm:$0xff]
    %v37 = vld [vmem:[#allocation2 + $0x10] sm:$0xff]
    %v38 = vld [vmem:[#allocation2 + $0x18] sm:$0xff]
    %v39 = vld [vmem:[%s2] sm:$0x1]
    %v41 = vlaneseq
    %v42 = vshrl.u32 %v41, 7
    %v43 = vsub.s32 0, %v42
    %v44 = vrot.slane %v39, %v43
    %vm46 = vcmask 261120
    %v48 = vsel %vm46, %v34, 0
    %50 = vmatprep.subr.mxu0 0.0
    %51 = vmatpush1.msra.mxu0 %v35
    %52 = vmatprep.subr.mxu0 0.0
    %53 = vmatpush1.msra.mxu0 %v36
    %54 = vmatprep.subr.mxu0 0.0
    %55 = vmatpush1.msra.mxu0 %v37
    %56 = vmatprep.subr.mxu0 0.0
    %57 = vmatpush1.msra.mxu0 %v38
    %58 = vmatprep.subr.mxu0 0.0
    %59 = vmatpush1.msra.mxu0 0.0
    %60 = vmatprep.subr.mxu0 0.0
    %61 = vmatpush1.msra.mxu0 0.0
    %62 = vmatprep.subr.mxu0 0.0
    %63 = vmatpush1.msra.mxu0 0.0
    %64 = vmatprep.subr.mxu0 0.0
    %65 = vmatpush1.msra.mxu0 0.0
    %66 = vmatprep.subr.mxu0 0.0
    %67 = vmatpush1.msra.mxu0 0.0
    %68 = vmatprep.subr.mxu0 0.0
    %69 = vmatpush1.msra.mxu0 0.0
    %70 = vmatprep.subr.mxu0 0.0
    %71 = vmatpush1.msra.mxu0 0.0
    %72 = vmatprep.subr.mxu0 0.0
    %73 = vmatpush1.msra.mxu0 0.0
    %74 = vmatprep.subr.mxu0 0.0
    %75 = vmatpush1.msra.mxu0 0.0
    %76 = vmatprep.subr.mxu0 0.0
    %77 = vmatpush1.msra.mxu0 0.0
    %78 = vmatprep.subr.mxu0 0.0
    %79 = vmatpush1.msra.mxu0 0.0
    %80 = vmatprep.subr.mxu0 0.0
    %81 = vmatpush1.msra.mxu0 0.0
    %82 = vmatprep.subr.mxu0 0.0
    %83 = vmatpush1.msra.mxu0 0.0
    %84 = vmatprep.subr.mxu0 0.0
    %85 = vmatpush1.msra.mxu0 0.0
    %86 = vmatprep.subr.mxu0 0.0
    %87 = vmatpush1.msra.mxu0 0.0
    %88 = vmatprep.subr.mxu0 0.0
    %89 = vmatpush1.msra.mxu0 0.0
    %90 = vmatprep.subr.mxu0 0.0
    %91 = vmatpush1.msra.mxu0 0.0
    %92 = vmatprep.subr.mxu0 0.0
    %93 = vmatpush1.msra.mxu0 0.0
    %94 = vmatprep.subr.mxu0 0.0
    %95 = vmatpush1.msra.mxu0 0.0
    %96 = vmatprep.subr.mxu0 0.0
    %97 = vmatpush1.msra.mxu0 0.0
    %98 = vmatprep.subr.mxu0 0.0
    %99 = vmatpush1.msra.mxu0 0.0
    %100 = vmatprep.subr.mxu0 0.0
    %101 = vmatpush1.msra.mxu0 0.0
    %102 = vmatprep.subr.mxu0 0.0
    %103 = vmatpush1.msra.mxu0 0.0
    %104 = vmatprep.subr.mxu0 0.0
    %105 = vmatpush1.msra.mxu0 0.0
    %106 = vmatprep.subr.mxu0 0.0
    %107 = vmatpush1.msra.mxu0 0.0
    %108 = vmatprep.subr.mxu0 0.0
    %109 = vmatpush1.msra.mxu0 0.0
    %110 = vmatprep.subr.mxu0 0.0
    %111 = vmatpush1.msra.mxu0 0.0
    %112 = vmatprep.subr.mxu0 0.0
    %113 = vmatpush1.msra.mxu0 0.0
    %114 = vmatprep.mubr.f32.mxu0 0.0
    %115 = vmatmul.mubr.f32.gmra.mrb[0].mxu0 %v48
    %v116 = vpop.f32.mrb[0].mxu0
    %v117 = vadd.f32 %v44, %v116
    %v118 = vpop.f32.mrb[0].mxu0
    %119 = vdwg.mxu0
    %vm120 = vcmask 523264
    %121 = vst.msk [vmem:[#allocation5] sm:$0xff] %vm120, %v117
    %v122 = vld [vmem:[%s3] sm:$0xff]
    %vm123 = vcmask 31744
    %v124 = vsel %vm123, %v122, -inf
    %125 = vmax.xlane.f32.xlu0 %v124
    %v126 = vpop.xlane.xlu0 %125
    %v127 = vsub.f32 %v122, %v126
    %v128 = vmul.f32 %v127, 1.442695
    %v129 = vpow.pop %v128
    %v130 = vsel %vm123, %v129, 0.0
    %131 = vadd.xlane.f32.xlu0 %v130
    %v132 = vpop.xlane.xlu0 %131
    %v133 = vlog2.pop %v132
    %v134 = vmul.f32 %v133, 0.6931472
    %v135 = vsub.f32 %v127, %v134
    %136 = vst.msk [vmem:[%s5] sm:$0xff] %vm123, %v135
    // Predicated region
    $region22: #{tpu_custom_call.1} parent=1 // pred_check
      _
    $region23: #{tpu_custom_call.1} parent=1 // pred_check_branch
      %138 = sbr.rel (0) target = $region25
    $region24: #{tpu_custom_call.1} parent=1 // pred_region
      %s140 = ssub.s32 128, 128
      %141 = vsyncadd [#allocation4], %s140
      %s143 = sshll.u32 [#allocation5], 4
      %s144 = int_to_ptr.vmem [resolvable:$true] %s143
      %146 = dma.vmem_to_hbm [thread:$0]  %s144, 128, %s4, [#allocation4]
    $region25: #{tpu_custom_call.1} parent=1 // pred_fallthru
      _
    // Predicated region
    $region26: #{tpu_custom_call.1} parent=1 // pred_check
      _
    $region27: #{tpu_custom_call.1} parent=1 // pred_check_branch
      %148 = sbr.rel (0) target = $region29
    $region28: #{tpu_custom_call.1} parent=1 // pred_region
      _
    $region29: #{tpu_custom_call.1} parent=1 // pred_fallthru
      _
    // Predicated region
    $region30: #{tpu_custom_call.1} parent=1 // pred_check
      _
    $region31: #{tpu_custom_call.1} parent=1 // pred_check_branch
      %150 = sbr.rel (0) target = $region33
    $region32: #{tpu_custom_call.1} parent=1 // pred_region
      %151 = dma.done [#allocation4], 128
    $region33: #{tpu_custom_call.1} parent=1 // pred_fallthru
      _
    // Predicated region
    $region34: #{tpu_custom_call.1} parent=1 // pred_check
      _
    $region35: #{tpu_custom_call.1} parent=1 // pred_check_branch
      %153 = sbr.rel (0) target = $region37
    $region36: #{tpu_custom_call.1} parent=1 // pred_region
      _
    $region37: #{tpu_custom_call.1} parent=1 // pred_fallthru
      _
    %154 = vsyncpa [#allocation3], 1
    %155 = vsyncpa [#allocation4], 1

</llo_original>
